<compile_context>
chip_gen: v7x
topology: tpu7x:2x2x1
jax: 0.10.0
libtpu: 0.0.40
codegen_flags: <defaults>
</compile_context>

<pallas_src>
import functools

import jax
import jax.numpy as jnp
from jax.experimental import pallas as pl
from jax.experimental.pallas import tpu as pltpu


def _round_down(x, m):
    return (x // m) * m


def _vmem_limit_bytes():
    """Derive a safe scoped-VMEM limit from the actual chip (v7x has only 64 MiB)."""
    try:
        info = pltpu.get_tpu_info()
        cap = getattr(info, "vmem_capacity_bytes", None)
        if cap:
            return int(cap * 3 // 4)
    except Exception:
        pass
    return 48 * 1024 * 1024  # > v5e/v6e scoped defaults, < v7x physical


def _hbm_bandwidth_guess():
    """Rough per-TensorCore HBM bandwidth (bytes/s) by generation, for the dispatcher."""
    try:
        kind = jax.devices()[0].device_kind.lower()
    except Exception:
        return 1.0e12
    if "v7" in kind:
        return 3.2e12
    if "v6" in kind:
        return 1.3e12
    if "v5" in kind:
        return 0.8e12
    return 1.0e12


def _pick_tb(B, target=128):
    """Batch tile: multiple of 8, and >= 2 batch tiles when possible (v7x megacore)."""
    if B <= 8:
        return B
    return int(min(target, max(8, _round_down(B // 2, 8))))


def _pick_tvc(TB):
    """Counts-chunk lane width: cap (TB, TVC) int32 at ~64 KiB (16 vregs) to avoid spills."""
    tvc = _round_down((64 * 1024) // max(TB * 4, 1), 128)
    return int(min(512, max(128, tvc)))


def _pick_tv(V, D, w_bytes, tvc, vmem_limit):
    """Vocab (W) tile: big enough to amortize grid-step overhead, bounded by VMEM budget."""
    budget = min(12 * 1024 * 1024, vmem_limit // 4)   # double-buffered W tile budget
    max_tv = max(1, budget // (2 * D * w_bytes))
    tv = min(V, 2048, max_tv)
    if tv < V:
        tv = max(tvc, _round_down(tv, tvc))
    return int(tv)


# ---------------------------------------------------------------------------
# Path 1: strip-mined counts @ W  (vocab axis = reduction axis, f32 VMEM accumulator)
# ---------------------------------------------------------------------------
def _counts_matmul_kernel(ids_ref, w_ref, out_ref, acc_ref, *, tvc, vocab_size, mask_last):
    # ids_ref: (TB, S) int32 VMEM   w_ref: (TV, D) VMEM   out_ref: (TB, D)   acc_ref: f32
    v_idx = pl.program_id(1)

    @pl.when(v_idx == 0)
    def _init():
        acc_ref[...] = jnp.zeros_like(acc_ref)

    ids = ids_ref[...]                       # (TB, S)
    TB, S = ids.shape
    TV, _D = w_ref.shape
    base = v_idx * TV

    # Strip-mine the W tile so the counts chunk never blows the vreg file.
    for start in range(0, TV, tvc):
        size = min(tvc, TV - start)
        cbase = base + start
        # (1, size) iota -> broadcast in the compare; ~size/128 vregs instead of TB*size/1024.
        tile_ids = jax.lax.broadcasted_iota(jnp.int32, (1, size), 1) + cbase

        # Integer count accumulation: 2 VPU ops per element per token.
        if S <= 32:
            counts = jnp.zeros((TB, size), jnp.int32)
            for s in range(S):
                counts = counts + (ids[:, s:s + 1] == tile_ids).astype(jnp.int32)
        else:
            def body(s, cnt):
                col = jax.lax.dynamic_slice_in_dim(ids, s, 1, axis=1)
                return cnt + (col == tile_ids).astype(jnp.int32)
            counts = jax.lax.fori_loop(0, S, body,
                                       jnp.zeros((TB, size), jnp.int32), unroll=8)

        w = w_ref[pl.ds(start, size), :]
        if mask_last:
            # Partial last vocab tile: zero the (uninitialized) padded rows so 0 * garbage
            # cannot produce NaN/Inf.  Only compiled in when V % TV != 0.
            row = jax.lax.broadcasted_iota(jnp.int32, (size, 1), 0) + cbase
            w = jnp.where(row < vocab_size, w, jnp.zeros_like(w))

        if w.dtype == jnp.bfloat16:
            if S <= 256:   # integer counts <= 256 are exact in bf16
                acc_ref[...] += jnp.dot(counts.astype(jnp.bfloat16), w,
                                        preferred_element_type=jnp.float32)
            else:
                acc_ref[...] += jnp.dot(counts.astype(jnp.float32),
                                        w.astype(jnp.float32),
                                        preferred_element_type=jnp.float32,
                                        precision=jax.lax.Precision.HIGHEST)
        else:
            w32 = w.astype(jnp.float32)
            if S <= 256:
                # Counts are exact in bf16 -> only W needs splitting: 2 MXU passes
                # (hi/lo bf16) give ~f32 accuracy at 2-3x the HIGHEST throughput.
                w_hi = w32.astype(jnp.bfloat16)
                w_lo = (w32 - w_hi.astype(jnp.float32)).astype(jnp.bfloat16)
                c_bf = counts.astype(jnp.bfloat16)
                acc_ref[...] += jnp.dot(c_bf, w_hi, preferred_element_type=jnp.float32)
                acc_ref[...] += jnp.dot(c_bf, w_lo, preferred_element_type=jnp.float32)
            else:
                acc_ref[...] += jnp.dot(counts.astype(jnp.float32), w32,
                                        preferred_element_type=jnp.float32,
                                        precision=jax.lax.Precision.HIGHEST)

    @pl.when(v_idx == pl.num_programs(1) - 1)
    def _finalize():
        out_ref[...] = acc_ref[...].astype(out_ref.dtype)


def wordvec_sum_counts(ids, weights, *, tb=None, tv=None):
    """out[b] = sum_s weights[ids[b, s]]  via per-vocab-tile counts @ W."""
    B, S = ids.shape
    V, D = weights.shape
    w_bytes = weights.dtype.itemsize
    vmem_limit = _vmem_limit_bytes()

    TB = int(tb) if tb is not None else _pick_tb(B)
    if TB >= B:
        TB = B
    elif TB % 8 != 0:
        TB = max(8, _round_down(TB, 8))

    TVC = _pick_tvc(TB)
    TV = int(tv) if tv is not None else _pick_tv(V, D, w_bytes, TVC, vmem_limit)
    TV = max(1, min(TV, V))
    TVC = min(TVC, TV)

    grid = (pl.cdiv(B, TB), pl.cdiv(V, TV))          # vocab (reduction) axis last
    needs_mask = (V % TV) != 0

    kernel = functools.partial(_counts_matmul_kernel,
                               tvc=TVC, vocab_size=V, mask_last=needs_mask)

    cost = pl.CostEstimate(
        flops=2 * B * V * D,
        transcendentals=0,
        bytes_accessed=grid[0] * V * D * w_bytes + B * S * 4 + B * D * w_bytes,
    )

    return pl.pallas_call(
        kernel,
        out_shape=jax.ShapeDtypeStruct((B, D), weights.dtype),
        grid_spec=pltpu.PrefetchScalarGridSpec(
            num_scalar_prefetch=0,
            grid=grid,
            in_specs=[
                pl.BlockSpec((TB, S), lambda i, v: (i, 0)),   # ids tile (reused across v)
                pl.BlockSpec((TV, D), lambda i, v: (v, 0)),   # streamed W tile
            ],
            out_specs=pl.BlockSpec((TB, D), lambda i, v: (i, 0)),
            scratch_shapes=[pltpu.VMEM((TB, D), jnp.float32)],
        ),
        compiler_params=pltpu.CompilerParams(
            dimension_semantics=("parallel", "arbitrary"),
            vmem_limit_bytes=vmem_limit,
        ),
        cost_estimate=cost,
    )(ids.astype(jnp.int32), weights)


# ---------------------------------------------------------------------------
# Path 2: row gather (flattened ids in SMEM, 8-slot DMA ring, vreg accumulator)
# ---------------------------------------------------------------------------
def _gather_sum_kernel(ids_ref, w_hbm_ref, out_ref, buf_ref, sem_ref, *, nslots, seq_len):
    # ids_ref : (B*S,) int32 in SMEM (scalar prefetch)
    # w_hbm_ref: (V, D) in HBM (pl.ANY) -- only the needed rows are copied in
    # out_ref : (1, 1, D) block; buf_ref: (nslots, 1, D) ring; sem_ref: DMA sems (nslots,)
    b = pl.program_id(0)
    base = b * seq_len
    D = out_ref.shape[-1]
    dist = nslots - 1            # prefetch distance < ring size -> no WAR hazard on slots

    def fetch(tok, slot):
        pltpu.make_async_copy(
            w_hbm_ref.at[pl.ds(tok, 1), :], buf_ref.at[slot], sem_ref.at[slot]
        ).start()

    # Prime the ring with the first `dist` row fetches.
    for s in range(min(dist, seq_len)):
        fetch(ids_ref[base + s], s)

    def body(s, acc):
        slot = s & (nslots - 1)
        nxt = s + dist
        # Hoist SMEM id reads above the wait (.wait() breaks SMEM sst->sld forwarding).
        tok_cur = ids_ref[base + s]
        tok_nxt = ids_ref[base + jnp.minimum(nxt, seq_len - 1)]
        pltpu.make_async_copy(
            w_hbm_ref.at[pl.ds(tok_cur, 1), :], buf_ref.at[slot], sem_ref.at[slot]
        ).wait()
        acc = acc + buf_ref[slot].astype(jnp.float32)      # (1, D) vreg accumulator

        @pl.when(nxt < seq_len)
        def _prefetch():
            fetch(tok_nxt, nxt & (nslots - 1))

        return acc

    acc = jax.lax.fori_loop(0, seq_len, body, jnp.zeros((1, D), jnp.float32))
    out_ref[0] = acc.astype(out_ref.dtype)                 # single store per utterance


def wordvec_sum_gather(ids, weights, *, nslots=8):
    """out[b] = sum_s weights[ids[b, s]]  via manual row-gather DMA ring (for S << V)."""
    assert nslots >= 2 and (nslots & (nslots - 1)) == 0, "nslots must be a power of two"
    B, S = ids.shape
    V, D = weights.shape
    w_bytes = weights.dtype.itemsize

    kernel = functools.partial(_gather_sum_kernel, nslots=nslots, seq_len=S)

    cost = pl.CostEstimate(
        flops=B * S * D,           # VPU adds only
        transcendentals=0,
        bytes_accessed=B * S * D * w_bytes + B * S * 4 + B * D * w_bytes,
    )

    out = pl.pallas_call(
        kernel,
        # (B, 1, D) so the block's last-two dims equal the full array dims (layout-legal),
        # reshaped back to (B, D) outside.
        out_shape=jax.ShapeDtypeStruct((B, 1, D), weights.dtype),
        grid_spec=pltpu.PrefetchScalarGridSpec(
            num_scalar_prefetch=1,                               # flattened ids -> SMEM
            grid=(B,),
            in_specs=[pl.BlockSpec(memory_space=pl.ANY)],        # W stays in HBM
            out_specs=pl.BlockSpec((1, 1, D), lambda b, ids_s: (b, 0, 0)),
            scratch_shapes=[
                pltpu.VMEM((nslots, 1, D), weights.dtype),       # row DMA ring
                pltpu.SemaphoreType.DMA((nslots,)),
            ],
        ),
        compiler_params=pltpu.CompilerParams(
            dimension_semantics=("parallel",),
            vmem_limit_bytes=_vmem_limit_bytes(),
        ),
        cost_estimate=cost,
    )(ids.reshape(-1).astype(jnp.int32), weights)
    return out.reshape(B, D)


# ---------------------------------------------------------------------------
# Dispatcher == WordVecAvg.forward
# ---------------------------------------------------------------------------
def wordvec_avg_forward(ids, weights):
    """Matches WordVecAvg.forward: embedding(ids).sum(dim=1)."""
    B, S = ids.shape
    V, D = weights.shape
    w_bytes = weights.dtype.itemsize
    tb = _pick_tb(B)
    bw = _hbm_bandwidth_guess()
    # Gather path is latency-bound: ~1 us HBM latency / ~7 rows in flight per token,
    # floored by the row's bandwidth cost.  Counts path re-reads the table once per
    # batch tile (pure bandwidth).
    gather_ns = B * S * max(150.0, D * w_bytes / bw * 1e9)
    counts_ns = pl.cdiv(B, tb) * V * D * w_bytes / bw * 1e9
    if gather_ns < counts_ns:
        return wordvec_sum_gather(ids, weights)
    return wordvec_sum_counts(ids, weights, tb=tb)


if __name__ == "__main__":
    # Small shapes consistent with the module: (batch, seq) token ids, (vocab, dim) table.
    B, S = 16, 16
    V, D = 512, 128

    key = jax.random.PRNGKey(0)
    k_w, k_ids, k_w2, k_ids2 = jax.random.split(key, 4)

    # Deterministic "random_init" table; zero row 0 to mimic nn.Embedding(padding_idx=0).
    weights = jax.random.normal(k_w, (V, D), dtype=jnp.float32)
    weights = weights.at[0].set(0.0)

    ids = jax.random.randint(k_ids, (B, S), 0, V, dtype=jnp.int32)
    ids = ids.at[:, -3:].set(0)        # trailing padding tokens, like padded utterances

    ref = jnp.take(weights, ids, axis=0).sum(axis=1)

    # 1) Counts @ W path, default tiling (strip-mined counts, 2-pass hi/lo f32 matmul).
    out_counts = jax.block_until_ready(wordvec_sum_counts(ids, weights))
    assert out_counts.shape == (B, D) and out_counts.dtype == weights.dtype
    assert jnp.allclose(out_counts, ref, atol=1e-3, rtol=1e-3), "counts path mismatch"

    # 2) Counts path with a multi-step vocab reduction (exercises the accumulator).
    out_counts_t = jax.block_until_ready(wordvec_sum_counts(ids, weights, tb=8, tv=128))
    assert jnp.allclose(out_counts_t, ref, atol=1e-3, rtol=1e-3), "tiled counts mismatch"

    # 3) Row-gather path (flattened ids in SMEM, 8-slot DMA ring, vreg accumulation).
    out_gather = jax.block_until_ready(wordvec_sum_gather(ids, weights))
    assert out_gather.shape == (B, D)
    assert jnp.allclose(out_gather, ref, atol=1e-3, rtol=1e-3), "gather path mismatch"

    # 4) bf16 table: single bf16 MXU pass, bf16 output dtype (matches PyTorch).
    w_bf16 = weights.astype(jnp.bfloat16)
    ref_bf16 = jnp.take(w_bf16.astype(jnp.float32), ids, axis=0).sum(axis=1)
    out_bf16 = jax.block_until_ready(wordvec_sum_counts(ids, w_bf16, tb=8, tv=128))
    assert out_bf16.dtype == jnp.bfloat16
    assert jnp.allclose(out_bf16.astype(jnp.float32), ref_bf16, atol=5e-2, rtol=5e-2), \
        "bf16 counts mismatch"

    # 5) Non-8/128-aligned vocab and batch: cdiv grid + masked last W tile.
    B2, V2 = 12, 500
    w2 = jax.random.normal(k_w2, (V2, D), dtype=jnp.float32).at[0].set(0.0)
    ids2 = jax.random.randint(k_ids2, (B2, S), 0, V2, dtype=jnp.int32)
    ref2 = jnp.take(w2, ids2, axis=0).sum(axis=1)
    out2c = jax.block_until_ready(wordvec_sum_counts(ids2, w2, tv=128))
    assert jnp.allclose(out2c, ref2, atol=1e-3, rtol=1e-3), "unaligned counts mismatch"
    out2g = jax.block_until_ready(wordvec_sum_gather(ids2, w2))
    assert jnp.allclose(out2g, ref2, atol=1e-3, rtol=1e-3), "unaligned gather mismatch"

    # 6) The dispatcher that WordVecAvg.forward maps to.
    out = jax.block_until_ready(wordvec_avg_forward(ids, weights))
    assert jnp.allclose(out, ref, atol=1e-3, rtol=1e-3), "dispatcher mismatch"

    print("KERNEL_OK")
</pallas_src>

<mosaic_0001>
module attributes {stable_mosaic.version = 11 : i64} {
  func.func @_counts_matmul_kernel(%arg0: i32, %arg1: i32, %arg2: memref<8x16xi32, #tpu.memory_space<vmem>>, %arg3: memref<512x128xf32, #tpu.memory_space<vmem>>, %arg4: memref<8x128xf32, #tpu.memory_space<vmem>>, %arg5: memref<8x128xf32, #tpu.memory_space<vmem>>) attributes {dimension_semantics = [#tpu.dimension_semantics<parallel>, #tpu.dimension_semantics<arbitrary>], iteration_bounds = array<i64: 2, 1>, scalar_prefetch = 0 : i64, scratch_operands = 1 : i64, tpu.core_type = #tpu.core_type<tc>, window_params = [{transform_indices = @transform_0, window_bounds = array<i64: 8, 16>}, {transform_indices = @transform_1, window_bounds = array<i64: 512, 128>}, {transform_indices = @transform_2, window_bounds = array<i64: 8, 128>}]} {
    %c0_i32 = arith.constant 0 : i32
    %0 = arith.cmpi eq, %arg1, %c0_i32 : i32
    %1 = arith.extui %0 : i1 to i32
    %c0_i32_0 = arith.constant 0 : i32
    %2 = arith.cmpi ne, %1, %c0_i32_0 : i32
    scf.if %2 {
      %cst_17 = arith.constant 0.000000e+00 : f32
      %123 = vector.broadcast %cst_17 : f32 to vector<8x128xf32>
      %c0_18 = arith.constant 0 : index
      %c0_19 = arith.constant 0 : index
      %124 = vector.load %arg5[%c0_18, %c0_19] : memref<8x128xf32, #tpu.memory_space<vmem>>, vector<8x128xf32>
      tpu.vector_store %arg5[%c0_18, %c0_19], %123 {strides = array<i32>} : memref<8x128xf32, #tpu.memory_space<vmem>>, vector<8x128xf32>,
    } else {
    }
    %c0 = arith.constant 0 : index
    %c0_1 = arith.constant 0 : index
    %3 = vector.load %arg2[%c0, %c0_1] : memref<8x16xi32, #tpu.memory_space<vmem>>, vector<8x16xi32>
    %c512_i32 = arith.constant 512 : i32
    %4 = arith.muli %arg1, %c512_i32 : i32
    %c0_i32_2 = arith.constant 0 : i32
    %5 = arith.addi %4, %c0_i32_2 : i32
    %6 = tpu.iota {dimensions = array<i32: 1>} : vector<1x512xi32>
    %7 = vector.broadcast %5 : i32 to vector<1x512xi32>
    %8 = arith.addi %6, %7 : vector<1x512xi32>
    %c0_i32_3 = arith.constant 0 : i32
    %9 = vector.broadcast %c0_i32_3 : i32 to vector<8x512xi32>
    %10 = vector.extract_strided_slice %3 {offsets = [0, 0], sizes = [8, 1], strides = [1, 1]} : vector<8x16xi32> to vector<8x1xi32>
    %11 = vector.broadcast %10 : vector<8x1xi32> to vector<8x512xi32>
    %12 = vector.broadcast %8 : vector<1x512xi32> to vector<8x512xi32>
    %13 = arith.cmpi eq, %11, %12 : vector<8x512xi32>
    %14 = arith.extui %13 : vector<8x512xi1> to vector<8x512xi32>
    %15 = arith.addi %9, %14 : vector<8x512xi32>
    %16 = vector.extract_strided_slice %3 {offsets = [0, 1], sizes = [8, 1], strides = [1, 1]} : vector<8x16xi32> to vector<8x1xi32>
    %17 = vector.broadcast %16 : vector<8x1xi32> to vector<8x512xi32>
    %18 = vector.broadcast %8 : vector<1x512xi32> to vector<8x512xi32>
    %19 = arith.cmpi eq, %17, %18 : vector<8x512xi32>
    %20 = arith.extui %19 : vector<8x512xi1> to vector<8x512xi32>
    %21 = arith.addi %15, %20 : vector<8x512xi32>
    %22 = vector.extract_strided_slice %3 {offsets = [0, 2], sizes = [8, 1], strides = [1, 1]} : vector<8x16xi32> to vector<8x1xi32>
    %23 = vector.broadcast %22 : vector<8x1xi32> to vector<8x512xi32>
    %24 = vector.broadcast %8 : vector<1x512xi32> to vector<8x512xi32>
    %25 = arith.cmpi eq, %23, %24 : vector<8x512xi32>
    %26 = arith.extui %25 : vector<8x512xi1> to vector<8x512xi32>
    %27 = arith.addi %21, %26 : vector<8x512xi32>
    %28 = vector.extract_strided_slice %3 {offsets = [0, 3], sizes = [8, 1], strides = [1, 1]} : vector<8x16xi32> to vector<8x1xi32>
    %29 = vector.broadcast %28 : vector<8x1xi32> to vector<8x512xi32>
    %30 = vector.broadcast %8 : vector<1x512xi32> to vector<8x512xi32>
    %31 = arith.cmpi eq, %29, %30 : vector<8x512xi32>
    %32 = arith.extui %31 : vector<8x512xi1> to vector<8x512xi32>
    %33 = arith.addi %27, %32 : vector<8x512xi32>
    %34 = vector.extract_strided_slice %3 {offsets = [0, 4], sizes = [8, 1], strides = [1, 1]} : vector<8x16xi32> to vector<8x1xi32>
    %35 = vector.broadcast %34 : vector<8x1xi32> to vector<8x512xi32>
    %36 = vector.broadcast %8 : vector<1x512xi32> to vector<8x512xi32>
    %37 = arith.cmpi eq, %35, %36 : vector<8x512xi32>
    %38 = arith.extui %37 : vector<8x512xi1> to vector<8x512xi32>
    %39 = arith.addi %33, %38 : vector<8x512xi32>
    %40 = vector.extract_strided_slice %3 {offsets = [0, 5], sizes = [8, 1], strides = [1, 1]} : vector<8x16xi32> to vector<8x1xi32>
    %41 = vector.broadcast %40 : vector<8x1xi32> to vector<8x512xi32>
    %42 = vector.broadcast %8 : vector<1x512xi32> to vector<8x512xi32>
    %43 = arith.cmpi eq, %41, %42 : vector<8x512xi32>
    %44 = arith.extui %43 : vector<8x512xi1> to vector<8x512xi32>
    %45 = arith.addi %39, %44 : vector<8x512xi32>
    %46 = vector.extract_strided_slice %3 {offsets = [0, 6], sizes = [8, 1], strides = [1, 1]} : vector<8x16xi32> to vector<8x1xi32>
    %47 = vector.broadcast %46 : vector<8x1xi32> to vector<8x512xi32>
    %48 = vector.broadcast %8 : vector<1x512xi32> to vector<8x512xi32>
    %49 = arith.cmpi eq, %47, %48 : vector<8x512xi32>
    %50 = arith.extui %49 : vector<8x512xi1> to vector<8x512xi32>
    %51 = arith.addi %45, %50 : vector<8x512xi32>
    %52 = vector.extract_strided_slice %3 {offsets = [0, 7], sizes = [8, 1], strides = [1, 1]} : vector<8x16xi32> to vector<8x1xi32>
    %53 = vector.broadcast %52 : vector<8x1xi32> to vector<8x512xi32>
    %54 = vector.broadcast %8 : vector<1x512xi32> to vector<8x512xi32>
    %55 = arith.cmpi eq, %53, %54 : vector<8x512xi32>
    %56 = arith.extui %55 : vector<8x512xi1> to vector<8x512xi32>
    %57 = arith.addi %51, %56 : vector<8x512xi32>
    %58 = vector.extract_strided_slice %3 {offsets = [0, 8], sizes = [8, 1], strides = [1, 1]} : vector<8x16xi32> to vector<8x1xi32>
    %59 = vector.broadcast %58 : vector<8x1xi32> to vector<8x512xi32>
    %60 = vector.broadcast %8 : vector<1x512xi32> to vector<8x512xi32>
    %61 = arith.cmpi eq, %59, %60 : vector<8x512xi32>
    %62 = arith.extui %61 : vector<8x512xi1> to vector<8x512xi32>
    %63 = arith.addi %57, %62 : vector<8x512xi32>
    %64 = vector.extract_strided_slice %3 {offsets = [0, 9], sizes = [8, 1], strides = [1, 1]} : vector<8x16xi32> to vector<8x1xi32>
    %65 = vector.broadcast %64 : vector<8x1xi32> to vector<8x512xi32>
    %66 = vector.broadcast %8 : vector<1x512xi32> to vector<8x512xi32>
    %67 = arith.cmpi eq, %65, %66 : vector<8x512xi32>
    %68 = arith.extui %67 : vector<8x512xi1> to vector<8x512xi32>
    %69 = arith.addi %63, %68 : vector<8x512xi32>
    %70 = vector.extract_strided_slice %3 {offsets = [0, 10], sizes = [8, 1], strides = [1, 1]} : vector<8x16xi32> to vector<8x1xi32>
    %71 = vector.broadcast %70 : vector<8x1xi32> to vector<8x512xi32>
    %72 = vector.broadcast %8 : vector<1x512xi32> to vector<8x512xi32>
    %73 = arith.cmpi eq, %71, %72 : vector<8x512xi32>
    %74 = arith.extui %73 : vector<8x512xi1> to vector<8x512xi32>
    %75 = arith.addi %69, %74 : vector<8x512xi32>
    %76 = vector.extract_strided_slice %3 {offsets = [0, 11], sizes = [8, 1], strides = [1, 1]} : vector<8x16xi32> to vector<8x1xi32>
    %77 = vector.broadcast %76 : vector<8x1xi32> to vector<8x512xi32>
    %78 = vector.broadcast %8 : vector<1x512xi32> to vector<8x512xi32>
    %79 = arith.cmpi eq, %77, %78 : vector<8x512xi32>
    %80 = arith.extui %79 : vector<8x512xi1> to vector<8x512xi32>
    %81 = arith.addi %75, %80 : vector<8x512xi32>
    %82 = vector.extract_strided_slice %3 {offsets = [0, 12], sizes = [8, 1], strides = [1, 1]} : vector<8x16xi32> to vector<8x1xi32>
    %83 = vector.broadcast %82 : vector<8x1xi32> to vector<8x512xi32>
    %84 = vector.broadcast %8 : vector<1x512xi32> to vector<8x512xi32>
    %85 = arith.cmpi eq, %83, %84 : vector<8x512xi32>
    %86 = arith.extui %85 : vector<8x512xi1> to vector<8x512xi32>
    %87 = arith.addi %81, %86 : vector<8x512xi32>
    %88 = vector.extract_strided_slice %3 {offsets = [0, 13], sizes = [8, 1], strides = [1, 1]} : vector<8x16xi32> to vector<8x1xi32>
    %89 = vector.broadcast %88 : vector<8x1xi32> to vector<8x512xi32>
    %90 = vector.broadcast %8 : vector<1x512xi32> to vector<8x512xi32>
    %91 = arith.cmpi eq, %89, %90 : vector<8x512xi32>
    %92 = arith.extui %91 : vector<8x512xi1> to vector<8x512xi32>
    %93 = arith.addi %87, %92 : vector<8x512xi32>
    %94 = vector.extract_strided_slice %3 {offsets = [0, 14], sizes = [8, 1], strides = [1, 1]} : vector<8x16xi32> to vector<8x1xi32>
    %95 = vector.broadcast %94 : vector<8x1xi32> to vector<8x512xi32>
    %96 = vector.broadcast %8 : vector<1x512xi32> to vector<8x512xi32>
    %97 = arith.cmpi eq, %95, %96 : vector<8x512xi32>
    %98 = arith.extui %97 : vector<8x512xi1> to vector<8x512xi32>
    %99 = arith.addi %93, %98 : vector<8x512xi32>
    %100 = vector.extract_strided_slice %3 {offsets = [0, 15], sizes = [8, 1], strides = [1, 1]} : vector<8x16xi32> to vector<8x1xi32>
    %101 = vector.broadcast %100 : vector<8x1xi32> to vector<8x512xi32>
    %102 = vector.broadcast %8 : vector<1x512xi32> to vector<8x512xi32>
    %103 = arith.cmpi eq, %101, %102 : vector<8x512xi32>
    %104 = arith.extui %103 : vector<8x512xi1> to vector<8x512xi32>
    %105 = arith.addi %99, %104 : vector<8x512xi32>
    %c0_4 = arith.constant 0 : index
    %c0_5 = arith.constant 0 : index
    %106 = vector.load %arg3[%c0_4, %c0_5] : memref<512x128xf32, #tpu.memory_space<vmem>>, vector<512x128xf32>
    %107 = arith.truncf %106 : vector<512x128xf32> to vector<512x128xbf16>
    %108 = arith.extf %107 : vector<512x128xbf16> to vector<512x128xf32>
    %109 = arith.subf %106, %108 : vector<512x128xf32>
    %110 = arith.truncf %109 : vector<512x128xf32> to vector<512x128xbf16>
    %111 = arith.sitofp %105 : vector<8x512xi32> to vector<8x512xbf16>
    %c0_6 = arith.constant 0 : index
    %c0_7 = arith.constant 0 : index
    %112 = vector.load %arg5[%c0_6, %c0_7] : memref<8x128xf32, #tpu.memory_space<vmem>>, vector<8x128xf32>
    %cst = arith.constant dense<0.000000e+00> : vector<8x128xf32>
    %113 = tpu.matmul %111, %107, %cst {dimension_numbers = #tpu.dot_dimension_numbers<[1], [0], [0], [1], [0, 0, 1, 1], [], []>} : vector<8x512xbf16>, vector<512x128xbf16>, vector<8x128xf32> -> vector<8x128xf32>
    %114 = arith.addf %112, %113 : vector<8x128xf32>
    %c0_8 = arith.constant 0 : index
    %c0_9 = arith.constant 0 : index
    %115 = vector.load %arg5[%c0_8, %c0_9] : memref<8x128xf32, #tpu.memory_space<vmem>>, vector<8x128xf32>
    tpu.vector_store %arg5[%c0_8, %c0_9], %114 {strides = array<i32>} : memref<8x128xf32, #tpu.memory_space<vmem>>, vector<8x128xf32>,
    %c0_10 = arith.constant 0 : index
    %c0_11 = arith.constant 0 : index
    %116 = vector.load %arg5[%c0_10, %c0_11] : memref<8x128xf32, #tpu.memory_space<vmem>>, vector<8x128xf32>
    %cst_12 = arith.constant dense<0.000000e+00> : vector<8x128xf32>
    %117 = tpu.matmul %111, %110, %cst_12 {dimension_numbers = #tpu.dot_dimension_numbers<[1], [0], [0], [1], [0, 0, 1, 1], [], []>} : vector<8x512xbf16>, vector<512x128xbf16>, vector<8x128xf32> -> vector<8x128xf32>
    %118 = arith.addf %116, %117 : vector<8x128xf32>
    %c0_13 = arith.constant 0 : index
    %c0_14 = arith.constant 0 : index
    %119 = vector.load %arg5[%c0_13, %c0_14] : memref<8x128xf32, #tpu.memory_space<vmem>>, vector<8x128xf32>
    tpu.vector_store %arg5[%c0_13, %c0_14], %118 {strides = array<i32>} : memref<8x128xf32, #tpu.memory_space<vmem>>, vector<8x128xf32>,
    %c0_i32_15 = arith.constant 0 : i32
    %120 = arith.cmpi eq, %arg1, %c0_i32_15 : i32
    %121 = arith.extui %120 : i1 to i32
    %c0_i32_16 = arith.constant 0 : i32
    %122 = arith.cmpi ne, %121, %c0_i32_16 : i32
    scf.if %122 {
      %c0_17 = arith.constant 0 : index
      %c0_18 = arith.constant 0 : index
      %123 = vector.load %arg5[%c0_17, %c0_18] : memref<8x128xf32, #tpu.memory_space<vmem>>, vector<8x128xf32>
      %c0_19 = arith.constant 0 : index
      %c0_20 = arith.constant 0 : index
      %124 = vector.load %arg4[%c0_19, %c0_20] : memref<8x128xf32, #tpu.memory_space<vmem>>, vector<8x128xf32>
      tpu.vector_store %arg4[%c0_19, %c0_20], %123 {strides = array<i32>} : memref<8x128xf32, #tpu.memory_space<vmem>>, vector<8x128xf32>,
    } else {
    }
    return
  }
  func.func @transform_0(%arg0: i32, %arg1: i32) -> (i32, i32) {
    %c0_i32 = arith.constant 0 : i32
    %c0_i32_0 = arith.constant 0 : i32
    return %arg0, %c0_i32 : i32, i32
  }
  func.func @transform_1(%arg0: i32, %arg1: i32) -> (i32, i32) {
    %c0_i32 = arith.constant 0 : i32
    %c0_i32_0 = arith.constant 0 : i32
    return %arg1, %c0_i32 : i32, i32
  }
  func.func @transform_2(%arg0: i32, %arg1: i32) -> (i32, i32) {
    %c0_i32 = arith.constant 0 : i32
    %c0_i32_0 = arith.constant 0 : i32
    return %arg0, %c0_i32 : i32, i32
  }
}

</mosaic_0001>

<llo_original>
// kernel: tpu_custom_call.1
$region0: #{tpu_custom_call.1}
  #allocation0 [shape = 'u32[]', space=smem, size = 0x4, offset = 0x4, fixed_abs, tag = 'smem constant byte address 0x4 - core index']
  #allocation1 [shape = 'u32[144,128]{1,0:T(1,128)}', space=vmem, size = 0x12000, scoped, tag = 'internal scratch']
  #allocation2 [shape = 'f32[8,128]{1,0:T(8,128)}', space=vmem, size = 0x1000, scoped, tag = 'scratch operand']
  %s0 = inlined_call_operand.hbm [shape: s32[16,16], index: 0, kind: input, shape index: {}]
  %s1 = inlined_call_operand.hbm [shape: f32[512,128], index: 1, kind: input, shape index: {}]
  %s2 = inlined_call_operand.hbm [shape: f32[16,128], index: 2, kind: output, shape index: {}]
  %s3 = sld [smem:[#allocation0]]
  $region57: #{tpu_custom_call.1} parent=0
    _
  %s5 = ssub.s32 1, %s3
  %s6 = scalar_select 0, %s5, %s3
  $region1: #{tpu_custom_call.1} parent=0
    #allocation3 [shape = 'u8[8192]{0}', space=vmem, size = 0x2000, scoped, tag = 'input window, operand 0']
    #allocation4 [shape = 's32[2]{0}', space=sflag, size = 0x8, scoped, tag = 'scoped memory for tpu_custom_call.1']
    #allocation5 [shape = 's32[2]{0}', space=sflag, size = 0x8, scoped, tag = 'scoped memory for tpu_custom_call.1']
    #allocation6 [shape = 'u8[262144]{0}', space=vmem, size = 0x40000, scoped, tag = 'input window, operand 1, single buffered']
    #allocation7 [shape = 's32[1]{0}', space=sflag, size = 0x4, scoped, tag = 'scoped memory for tpu_custom_call.1']
    #allocation8 [shape = 'u8[8192]{0}', space=vmem, size = 0x2000, scoped, tag = 'output window, operand 0']
    %7 = vsyncpa [#allocation4], 0
    %s8 = scalar_lea.sflag [#allocation4], 1
    %9 = vsyncpa %s8, 0
    %10 = vsyncpa [#allocation7], 0
    %11 = vsyncpa [#allocation5], 0
    %s12 = scalar_lea.sflag [#allocation5], 1
    %13 = vsyncpa %s12, 0
    loop: start=0, step=1, limit=4
    $region2: #{tpu_custom_call.1} parent=1 // loop_pre_header
      _
    $region3: #{tpu_custom_call.1} parent=1 // loop_header
      %s15 = sphi 0, %s19
      %p16 = scmp.ge.s32.totalorder %s15, 4
      %s22 = sphi 0, %s34
      %s23 = sphi 0, %s30
      %s24 = sphi 0, %s22
      %s25 = sphi 0, %s23
      %s26 = sphi 0, %s24
      %s27 = sphi 0, %s25
      %s37 = sphi 0, %s39
      %s40 = sphi 0, %s37
      %s41 = sphi 0, %s40
      %s57 = sphi 0, %s41
      %s63 = sphi 0, %s65
      %s66 = sphi 0, %s63
      %s67 = sphi 0, %s66
      %s83 = sphi 0, %s67
      %s89 = sphi 0, %s91
      %s92 = sphi 0, %s89
      %s93 = sphi 0, %s92
      %s109 = sphi 0, %s93
    $region4: #{tpu_custom_call.1} parent=1 // loop_header_branch
      %18 = sbr.rel (%p16) target = $region8
    $region5: #{tpu_custom_call.1} parent=1 // loop_body
      %s20 = ssub.s32 %s15, 1
      %s21 = ssub.s32 %s15, 2
      %s28 = sadd.s32 1, %s23
      %p29 = scmp.ge.s32.totalorder %s28, 1
      %s30 = scalar_select %p29, 0, %s28
      %s31 = sadd.s32 1, %s22
      %s32 = scalar_select %p29, %s31, %s22
      %p33 = scmp.ge.s32.totalorder %s32, 2
      %s34 = scalar_select %p33, 0, %s32
      %s35 = ssub.s32 %s22, %s34
      %p36 = scmp.eq.s32.totalorder %s35, 0
      %s38 = sadd.s32 %s37, 1
      %s39 = scalar_select %p36, %s37, %s38
      %p42 = pneg %p36
      %p43 = scmp.eq.s32.totalorder %s15, 1
      %p44 = por %p42, %p43
      %p45 = scmp.ne.s32.totalorder %s37, %s40
      %p46 = scmp.eq.s32.totalorder %s15, 0
      %p47 = por %p45, %p46
      %p48 = scmp.ne.s32.totalorder %s37, %s40
      %p49 = scmp.eq.s32.totalorder %s20, 1
      %p50 = por %p48, %p49
      %p51 = scmp.ne.s32.totalorder %s40, %s41
      %p52 = scmp.eq.s32.totalorder %s20, 0
      %p53 = por %p51, %p52
      %p54 = scmp.ne.s32.totalorder %s40, %s41
      %p55 = scmp.eq.s32.totalorder %s21, 1
      %p56 = por %p54, %p55
      %p58 = scmp.ne.s32.totalorder %s41, %s57
      %p59 = scmp.eq.s32.totalorder %s21, 0
      %p60 = por %p58, %p59
      %s61 = ssub.s32 %s23, %s30
      %p62 = scmp.eq.s32.totalorder %s61, 0
      %s64 = sadd.s32 %s63, 1
      %s65 = scalar_select %p62, %s63, %s64
      %p68 = pneg %p62
      %p69 = scmp.eq.s32.totalorder %s15, 1
      %p70 = por %p68, %p69
      %p71 = scmp.ne.s32.totalorder %s63, %s66
      %p72 = scmp.eq.s32.totalorder %s15, 0
      %p73 = por %p71, %p72
      %p74 = scmp.ne.s32.totalorder %s63, %s66
      %p75 = scmp.eq.s32.totalorder %s20, 1
      %p76 = por %p74, %p75
      %p77 = scmp.ne.s32.totalorder %s66, %s67
      %p78 = scmp.eq.s32.totalorder %s20, 0
      %p79 = por %p77, %p78
      %p80 = scmp.ne.s32.totalorder %s66, %s67
      %p81 = scmp.eq.s32.totalorder %s21, 1
      %p82 = por %p80, %p81
      %p84 = scmp.ne.s32.totalorder %s67, %s83
      %p85 = scmp.eq.s32.totalorder %s21, 0
      %p86 = por %p84, %p85
      %s87 = ssub.s32 %s22, %s34
      %p88 = scmp.eq.s32.totalorder %s87, 0
      %s90 = sadd.s32 %s89, 1
      %s91 = scalar_select %p88, %s89, %s90
      %p94 = pneg %p88
      %p95 = scmp.eq.s32.totalorder %s15, 1
      %p96 = por %p94, %p95
      %p97 = scmp.ne.s32.totalorder %s89, %s92
      %p98 = scmp.eq.s32.totalorder %s15, 0
      %p99 = por %p97, %p98
      %p100 = scmp.ne.s32.totalorder %s89, %s92
      %p101 = scmp.eq.s32.totalorder %s20, 1
      %p102 = por %p100, %p101
      %p103 = scmp.ne.s32.totalorder %s92, %s93
      %p104 = scmp.eq.s32.totalorder %s20, 0
      %p105 = por %p103, %p104
      %p106 = scmp.ne.s32.totalorder %s92, %s93
      %p107 = scmp.eq.s32.totalorder %s21, 1
      %p108 = por %p106, %p107
      %p110 = scmp.ne.s32.totalorder %s93, %s109
      %p111 = scmp.eq.s32.totalorder %s21, 0
      %p112 = por %p110, %p111
      %p113 = scmp.le.s32.totalorder 1, %s15
      %p114 = scmp.lt.s32.totalorder %s15, 3
      %p115 = pnand %p113, %p114
      %p116 = pneg %p115
      // Predicated region
      $region9: #{tpu_custom_call.1} parent=5 // pred_check
        _
      $region10: #{tpu_custom_call.1} parent=5 // pred_check_branch
        %118 = sbr.rel (%p115) target = $region12
      $region11: #{tpu_custom_call.1} parent=5 // pred_region
        %s119 = ssub.s32 %s15, 1
        // Predicated region
        $region13: #{tpu_custom_call.1} parent=11 // pred_check
          %p120 = pneg %p79
        $region14: #{tpu_custom_call.1} parent=11 // pred_check_branch
          %122 = sbr.rel (%p120) target = $region16
        $region15: #{tpu_custom_call.1} parent=11 // pred_region
          %s123 = smul.u32 64, %s25
          %s125 = ssub.s32 8192, 8192
          %126 = vsyncadd [#allocation7], %s125
          %s127 = smul.addr %s123, 128
          %s128 = scalar_lea.hbm %s1, %s127
          %s129 = sshll.u32 [#allocation6], 4
          %s130 = int_to_ptr.vmem [resolvable:$true] %s129
          %135 = dma.hbm_to_vmem [thread:$0]  %s128, 8192, %s130, [#allocation7], 128, 128, 8
        $region16: #{tpu_custom_call.1} parent=11 // pred_fallthru
          _
      $region12: #{tpu_custom_call.1} parent=5 // pred_fallthru
        _
      %p136 = scmp.lt.s32.totalorder %s15, 2
      // Predicated region
      $region17: #{tpu_custom_call.1} parent=5 // pred_check
        %p137 = pneg %p136
      $region18: #{tpu_custom_call.1} parent=5 // pred_check_branch
        %139 = sbr.rel (%p137) target = $region20
      $region19: #{tpu_custom_call.1} parent=5 // pred_region
        // Predicated region
        $region21: #{tpu_custom_call.1} parent=19 // pred_check
          %p140 = pneg %p47
        $region22: #{tpu_custom_call.1} parent=19 // pred_check_branch
          %142 = sbr.rel (%p140) target = $region24
        $region23: #{tpu_custom_call.1} parent=19 // pred_region
          %s143 = sand.u32 %s37, 1
          %s144 = scalar_lea.sflag [#allocation4], %s143
          %s145 = sand.u32 %s37, 1
          %s146 = smul.addr %s145, 8
          %s147 = scalar_lea.vmem [#allocation3], %s146
          %s149 = ssub.s32 128, 128
          %150 = vsyncadd %s144, %s149
          %s151 = smul.addr %s22, 128
          %s152 = scalar_lea.hbm %s0, %s151
          %s154 = sshll.u32 %s147, 4
          %s155 = int_to_ptr.vmem [resolvable:$true] %s154
          %157 = dma.hbm_to_vmem [thread:$0]  %s152, 128, %s155, %s144
        $region24: #{tpu_custom_call.1} parent=19 // pred_fallthru
          _
      $region20: #{tpu_custom_call.1} parent=5 // pred_fallthru
        _
      %p158 = scmp.le.s32.totalorder 1, %s15
      %p159 = scmp.lt.s32.totalorder %s15, 3
      %p160 = pnand %p158, %p159
      %p161 = pneg %p160
      // Predicated region
      $region25: #{tpu_custom_call.1} parent=5 // pred_check
        _
      $region26: #{tpu_custom_call.1} parent=5 // pred_check_branch
        %163 = sbr.rel (%p160) target = $region28
      $region27: #{tpu_custom_call.1} parent=5 // pred_region
        %s164 = ssub.s32 %s15, 1
        %s165 = sand.u32 %s40, 1
        %s166 = scalar_lea.sflag [#allocation4], %s165
        %s167 = sand.u32 %s40, 1
        %s168 = smul.addr %s167, 8
        %s169 = scalar_lea.vmem [#allocation3], %s168
        // Predicated region
        $region29: #{tpu_custom_call.1} parent=27 // pred_check
          %p170 = pneg %p53
        $region30: #{tpu_custom_call.1} parent=27 // pred_check_branch
          %172 = sbr.rel (%p170) target = $region32
        $region31: #{tpu_custom_call.1} parent=27 // pred_region
          %173 = dma.done %s166, 128
        $region32: #{tpu_custom_call.1} parent=27 // pred_fallthru
          _
        // Predicated region
        $region33: #{tpu_custom_call.1} parent=27 // pred_check
          %p174 = pneg %p79
        $region34: #{tpu_custom_call.1} parent=27 // pred_check_branch
          %176 = sbr.rel (%p174) target = $region36
        $region35: #{tpu_custom_call.1} parent=27 // pred_region
          %177 = dma.done [#allocation7], 8192
        $region36: #{tpu_custom_call.1} parent=27 // pred_fallthru
          _
        %s178 = sand.u32 %s40, 1
        %s179 = scalar_lea.sflag [#allocation4], %s178
        %s180 = sand.u32 %s40, 1
        %s181 = smul.addr %s180, 8
        %s182 = scalar_lea.vmem [#allocation3], %s181
        %p183 = pneg %p53
        %p184 = pneg %p50
        %p185 = pneg %p79
        %p186 = pneg %p76
        %p187 = pneg %p105
        %p188 = pneg %p102
        %s189 = sand.u32 %s92, 1
        %s190 = scalar_lea.sflag [#allocation5], %s189
        %s191 = sand.u32 %s92, 1
        %s192 = smul.addr %s191, 8
        %s193 = scalar_lea.vmem [#allocation8], %s192
        %s194 = smul.u32 64, %s25
        %p196 = scmp.eq.s32.totalorder %s25, 0
        // Predicated region
        $region37: #{tpu_custom_call.1} parent=27 // pred_check
          %p197 = pneg %p196
        $region38: #{tpu_custom_call.1} parent=27 // pred_check_branch
          %199 = sbr.rel (%p197) target = $region40
        $region39: #{tpu_custom_call.1} parent=27 // pred_region
          %200 = vst [vmem:[#allocation2] sm:$0xff] 0.0
        $region40: #{tpu_custom_call.1} parent=27 // pred_fallthru
          _
        %v201 = vld [vmem:[%s169] sm:$0xff]
        %s202 = smul.u32 %s25, 512
        %v203 = vlaneseq
        %v204 = vand.u32 %v203, 127
        %v205 = vadd.s32 %v204, 128
        %v206 = vadd.s32 %v204, 256
        %v207 = vadd.s32 %v204, 384
        %v208 = vstv %s202
        %v209 = vadd.s32 %v204, %v208
        %v210 = vadd.s32 %v205, %v208
        %v211 = vadd.s32 %v206, %v208
        %v212 = vadd.s32 %v207, %v208
        %213 = vset.pattern.permute.xlu0 0
        %214 = vperm.xlu0 %213, %v201
        %v215 = vpop.permute.xlu0 %214
        %vm216 = vcmp.eq.s32.totalorder %v215, %v209
        %vm217 = vcmp.eq.s32.totalorder %v215, %v210
        %vm218 = vcmp.eq.s32.totalorder %v215, %v211
        %vm219 = vcmp.eq.s32.totalorder %v215, %v212
        %v220 = vsel %vm216, 1, 0
        %v221 = vsel %vm217, 1, 0
        %v222 = vsel %vm218, 1, 0
        %v223 = vsel %vm219, 1, 0
        %224 = vset.pattern.permute.xlu0 1
        %225 = vperm.xlu0 %224, %v201
        %v226 = vpop.permute.xlu0 %225
        %vm227 = vcmp.eq.s32.totalorder %v226, %v209
        %vm228 = vcmp.eq.s32.totalorder %v226, %v210
        %vm229 = vcmp.eq.s32.totalorder %v226, %v211
        %vm230 = vcmp.eq.s32.totalorder %v226, %v212
        %v231 = vsel %vm227, 1, 0
        %v232 = vsel %vm228, 1, 0
        %v233 = vsel %vm229, 1, 0
        %v234 = vsel %vm230, 1, 0
        %v235 = vadd.s32 %v220, %v231
        %v236 = vadd.s32 %v221, %v232
        %v237 = vadd.s32 %v222, %v233
        %v238 = vadd.s32 %v223, %v234
        %239 = vset.pattern.permute.xlu0 2
        %240 = vperm.xlu0 %239, %v201
        %v241 = vpop.permute.xlu0 %240
        %vm242 = vcmp.eq.s32.totalorder %v241, %v209
        %vm243 = vcmp.eq.s32.totalorder %v241, %v210
        %vm244 = vcmp.eq.s32.totalorder %v241, %v211
        %vm245 = vcmp.eq.s32.totalorder %v241, %v212
        %v246 = vsel %vm242, 1, 0
        %v247 = vsel %vm243, 1, 0
        %v248 = vsel %vm244, 1, 0
        %v249 = vsel %vm245, 1, 0
        %v250 = vadd.s32 %v235, %v246
        %v251 = vadd.s32 %v236, %v247
        %v252 = vadd.s32 %v237, %v248
        %v253 = vadd.s32 %v238, %v249
        %254 = vset.pattern.permute.xlu0 3
        %255 = vperm.xlu0 %254, %v201
        %v256 = vpop.permute.xlu0 %255
        %vm257 = vcmp.eq.s32.totalorder %v256, %v209
        %vm258 = vcmp.eq.s32.totalorder %v256, %v210
        %vm259 = vcmp.eq.s32.totalorder %v256, %v211
        %vm260 = vcmp.eq.s32.totalorder %v256, %v212
        %v261 = vsel %vm257, 1, 0
        %v262 = vsel %vm258, 1, 0
        %v263 = vsel %vm259, 1, 0
        %v264 = vsel %vm260, 1, 0
        %v265 = vadd.s32 %v250, %v261
        %v266 = vadd.s32 %v251, %v262
        %v267 = vadd.s32 %v252, %v263
        %v268 = vadd.s32 %v253, %v264
        %269 = vset.pattern.permute.xlu0 4
        %270 = vperm.xlu0 %269, %v201
        %v271 = vpop.permute.xlu0 %270
        %vm272 = vcmp.eq.s32.totalorder %v271, %v209
        %vm273 = vcmp.eq.s32.totalorder %v271, %v210
        %vm274 = vcmp.eq.s32.totalorder %v271, %v211
        %vm275 = vcmp.eq.s32.totalorder %v271, %v212
        %v276 = vsel %vm272, 1, 0
        %v277 = vsel %vm273, 1, 0
        %v278 = vsel %vm274, 1, 0
        %v279 = vsel %vm275, 1, 0
        %v280 = vadd.s32 %v265, %v276
        %v281 = vadd.s32 %v266, %v277
        %v282 = vadd.s32 %v267, %v278
        %v283 = vadd.s32 %v268, %v279
        %284 = vset.pattern.permute.xlu0 5
        %285 = vperm.xlu0 %284, %v201
        %v286 = vpop.permute.xlu0 %285
        %vm287 = vcmp.eq.s32.totalorder %v286, %v209
        %vm288 = vcmp.eq.s32.totalorder %v286, %v210
        %vm289 = vcmp.eq.s32.totalorder %v286, %v211
        %vm290 = vcmp.eq.s32.totalorder %v286, %v212
        %v291 = vsel %vm287, 1, 0
        %v292 = vsel %vm288, 1, 0
        %v293 = vsel %vm289, 1, 0
        %v294 = vsel %vm290, 1, 0
        %v295 = vadd.s32 %v280, %v291
        %v296 = vadd.s32 %v281, %v292
        %v297 = vadd.s32 %v282, %v293
        %v298 = vadd.s32 %v283, %v294
        %299 = vset.pattern.permute.xlu0 6
        %300 = vperm.xlu0 %299, %v201
        %v301 = vpop.permute.xlu0 %300
        %vm302 = vcmp.eq.s32.totalorder %v301, %v209
        %vm303 = vcmp.eq.s32.totalorder %v301, %v210
        %vm304 = vcmp.eq.s32.totalorder %v301, %v211
        %vm305 = vcmp.eq.s32.totalorder %v301, %v212
        %v306 = vsel %vm302, 1, 0
        %v307 = vsel %vm303, 1, 0
        %v308 = vsel %vm304, 1, 0
        %v309 = vsel %vm305, 1, 0
        %v310 = vadd.s32 %v295, %v306
        %v311 = vadd.s32 %v296, %v307
        %v312 = vadd.s32 %v297, %v308
        %v313 = vadd.s32 %v298, %v309
        %314 = vset.pattern.permute.xlu0 7
        %315 = vperm.xlu0 %314, %v201
        %v316 = vpop.permute.xlu0 %315
        %vm317 = vcmp.eq.s32.totalorder %v316, %v209
        %vm318 = vcmp.eq.s32.totalorder %v316, %v210
        %vm319 = vcmp.eq.s32.totalorder %v316, %v211
        %vm320 = vcmp.eq.s32.totalorder %v316, %v212
        %v321 = vsel %vm317, 1, 0
        %v322 = vsel %vm318, 1, 0
        %v323 = vsel %vm319, 1, 0
        %v324 = vsel %vm320, 1, 0
        %v325 = vadd.s32 %v310, %v321
        %v326 = vadd.s32 %v311, %v322
        %v327 = vadd.s32 %v312, %v323
        %v328 = vadd.s32 %v313, %v324
        %329 = vset.pattern.permute.xlu0 8
        %330 = vperm.xlu0 %329, %v201
        %v331 = vpop.permute.xlu0 %330
        %vm332 = vcmp.eq.s32.totalorder %v331, %v209
        %vm333 = vcmp.eq.s32.totalorder %v331, %v210
        %vm334 = vcmp.eq.s32.totalorder %v331, %v211
        %vm335 = vcmp.eq.s32.totalorder %v331, %v212
        %v336 = vsel %vm332, 1, 0
        %v337 = vsel %vm333, 1, 0
        %v338 = vsel %vm334, 1, 0
        %v339 = vsel %vm335, 1, 0
        %v340 = vadd.s32 %v325, %v336
        %v341 = vadd.s32 %v326, %v337
        %v342 = vadd.s32 %v327, %v338
        %v343 = vadd.s32 %v328, %v339
        %344 = vset.pattern.permute.xlu0 9
        %345 = vperm.xlu0 %344, %v201
        %v346 = vpop.permute.xlu0 %345
        %vm347 = vcmp.eq.s32.totalorder %v346, %v209
        %vm348 = vcmp.eq.s32.totalorder %v346, %v210
        %vm349 = vcmp.eq.s32.totalorder %v346, %v211
        %vm350 = vcmp.eq.s32.totalorder %v346, %v212
        %v351 = vsel %vm347, 1, 0
        %v352 = vsel %vm348, 1, 0
        %v353 = vsel %vm349, 1, 0
        %v354 = vsel %vm350, 1, 0
        %v355 = vadd.s32 %v340, %v351
        %v356 = vadd.s32 %v341, %v352
        %v357 = vadd.s32 %v342, %v353
        %v358 = vadd.s32 %v343, %v354
        %359 = vset.pattern.permute.xlu0 10
        %360 = vperm.xlu0 %359, %v201
        %v361 = vpop.permute.xlu0 %360
        %vm362 = vcmp.eq.s32.totalorder %v361, %v209
        %vm363 = vcmp.eq.s32.totalorder %v361, %v210
        %vm364 = vcmp.eq.s32.totalorder %v361, %v211
        %vm365 = vcmp.eq.s32.totalorder %v361, %v212
        %v366 = vsel %vm362, 1, 0
        %v367 = vsel %vm363, 1, 0
        %v368 = vsel %vm364, 1, 0
        %v369 = vsel %vm365, 1, 0
        %v370 = vadd.s32 %v355, %v366
        %v371 = vadd.s32 %v356, %v367
        %v372 = vadd.s32 %v357, %v368
        %v373 = vadd.s32 %v358, %v369
        %374 = vset.pattern.permute.xlu0 11
        %375 = vperm.xlu0 %374, %v201
        %v376 = vpop.permute.xlu0 %375
        %vm377 = vcmp.eq.s32.totalorder %v376, %v209
        %vm378 = vcmp.eq.s32.totalorder %v376, %v210
        %vm379 = vcmp.eq.s32.totalorder %v376, %v211
        %vm380 = vcmp.eq.s32.totalorder %v376, %v212
        %v381 = vsel %vm377, 1, 0
        %v382 = vsel %vm378, 1, 0
        %v383 = vsel %vm379, 1, 0
        %v384 = vsel %vm380, 1, 0
        %v385 = vadd.s32 %v370, %v381
        %v386 = vadd.s32 %v371, %v382
        %v387 = vadd.s32 %v372, %v383
        %v388 = vadd.s32 %v373, %v384
        %389 = vset.pattern.permute.xlu0 12
        %390 = vperm.xlu0 %389, %v201
        %v391 = vpop.permute.xlu0 %390
        %vm392 = vcmp.eq.s32.totalorder %v391, %v209
        %vm393 = vcmp.eq.s32.totalorder %v391, %v210
        %vm394 = vcmp.eq.s32.totalorder %v391, %v211
        %vm395 = vcmp.eq.s32.totalorder %v391, %v212
        %v396 = vsel %vm392, 1, 0
        %v397 = vsel %vm393, 1, 0
        %v398 = vsel %vm394, 1, 0
        %v399 = vsel %vm395, 1, 0
        %v400 = vadd.s32 %v385, %v396
        %v401 = vadd.s32 %v386, %v397
        %v402 = vadd.s32 %v387, %v398
        %v403 = vadd.s32 %v388, %v399
        %404 = vset.pattern.permute.xlu0 13
        %405 = vperm.xlu0 %404, %v201
        %v406 = vpop.permute.xlu0 %405
        %vm407 = vcmp.eq.s32.totalorder %v406, %v209
        %vm408 = vcmp.eq.s32.totalorder %v406, %v210
        %vm409 = vcmp.eq.s32.totalorder %v406, %v211
        %vm410 = vcmp.eq.s32.totalorder %v406, %v212
        %v411 = vsel %vm407, 1, 0
        %v412 = vsel %vm408, 1, 0
        %v413 = vsel %vm409, 1, 0
        %v414 = vsel %vm410, 1, 0
        %v415 = vadd.s32 %v400, %v411
        %v416 = vadd.s32 %v401, %v412
        %v417 = vadd.s32 %v402, %v413
        %v418 = vadd.s32 %v403, %v414
        %419 = vset.pattern.permute.xlu0 14
        %420 = vperm.xlu0 %419, %v201
        %v421 = vpop.permute.xlu0 %420
        %vm422 = vcmp.eq.s32.totalorder %v421, %v209
        %vm423 = vcmp.eq.s32.totalorder %v421, %v210
        %vm424 = vcmp.eq.s32.totalorder %v421, %v211
        %vm425 = vcmp.eq.s32.totalorder %v421, %v212
        %v426 = vsel %vm422, 1, 0
        %v427 = vsel %vm423, 1, 0
        %v428 = vsel %vm424, 1, 0
        %v429 = vsel %vm425, 1, 0
        %v430 = vadd.s32 %v415, %v426
        %v431 = vadd.s32 %v416, %v427
        %v432 = vadd.s32 %v417, %v428
        %v433 = vadd.s32 %v418, %v429
        %434 = vset.pattern.permute.xlu0 15
        %435 = vperm.xlu0 %434, %v201
        %v436 = vpop.permute.xlu0 %435
        %vm437 = vcmp.eq.s32.totalorder %v436, %v209
        %vm438 = vcmp.eq.s32.totalorder %v436, %v210
        %vm439 = vcmp.eq.s32.totalorder %v436, %v211
        %vm440 = vcmp.eq.s32.totalorder %v436, %v212
        %v441 = vsel %vm437, 1, 0
        %v442 = vsel %vm438, 1, 0
        %v443 = vsel %vm439, 1, 0
        %v444 = vsel %vm440, 1, 0
        %v445 = vadd.s32 %v430, %v441
        %v446 = vadd.s32 %v431, %v442
        %v447 = vadd.s32 %v432, %v443
        %v448 = vadd.s32 %v433, %v444
        %v449 = vld [vmem:[#allocation6] sm:$0xff]
        %v450 = vld [vmem:[#allocation6 + $0x8] sm:$0xff]
        %v451 = vld [vmem:[#allocation6 + $0x10] sm:$0xff]
        %v452 = vld [vmem:[#allocation6 + $0x18] sm:$0xff]
        %v453 = vld [vmem:[#allocation6 + $0x20] sm:$0xff]
        %v454 = vld [vmem:[#allocation6 + $0x28] sm:$0xff]
        %v455 = vld [vmem:[#allocation6 + $0x30] sm:$0xff]
        %v456 = vld [vmem:[#allocation6 + $0x38] sm:$0xff]
        %v457 = vld [vmem:[#allocation6 + $0x40] sm:$0xff]
        %v458 = vld [vmem:[#allocation6 + $0x48] sm:$0xff]
        %v459 = vld [vmem:[#allocation6 + $0x50] sm:$0xff]
        %v460 = vld [vmem:[#allocation6 + $0x58] sm:$0xff]
        %v461 = vld [vmem:[#allocation6 + $0x60] sm:$0xff]
        %v462 = vld [vmem:[#allocation6 + $0x68] sm:$0xff]
        %v463 = vld [vmem:[#allocation6 + $0x70] sm:$0xff]
        %v464 = vld [vmem:[#allocation6 + $0x78] sm:$0xff]
        %v465 = vld [vmem:[#allocation6 + $0x80] sm:$0xff]
        %v466 = vld [vmem:[#allocation6 + $0x88] sm:$0xff]
        %v467 = vld [vmem:[#allocation6 + $0x90] sm:$0xff]
        %v468 = vld [vmem:[#allocation6 + $0x98] sm:$0xff]
        %v469 = vld [vmem:[#allocation6 + $0xa0] sm:$0xff]
        %v470 = vld [vmem:[#allocation6 + $0xa8] sm:$0xff]
        %v471 = vld [vmem:[#allocation6 + $0xb0] sm:$0xff]
        %v472 = vld [vmem:[#allocation6 + $0xb8] sm:$0xff]
        %v473 = vld [vmem:[#allocation6 + $0xc0] sm:$0xff]
        %v474 = vld [vmem:[#allocation6 + $0xc8] sm:$0xff]
        %v475 = vld [vmem:[#allocation6 + $0xd0] sm:$0xff]
        %v476 = vld [vmem:[#allocation6 + $0xd8] sm:$0xff]
        %v477 = vld [vmem:[#allocation6 + $0xe0] sm:$0xff]
        %v478 = vld [vmem:[#allocation6 + $0xe8] sm:$0xff]
        %v479 = vld [vmem:[#allocation6 + $0xf0] sm:$0xff]
        %v480 = vld [vmem:[#allocation6 + $0xf8] sm:$0xff]
        %v481 = vld [vmem:[#allocation6 + $0x100] sm:$0xff]
        %v482 = vld [vmem:[#allocation6 + $0x108] sm:$0xff]
        %v483 = vld [vmem:[#allocation6 + $0x110] sm:$0xff]
        %v484 = vld [vmem:[#allocation6 + $0x118] sm:$0xff]
        %v485 = vld [vmem:[#allocation6 + $0x120] sm:$0xff]
        %v486 = vld [vmem:[#allocation6 + $0x128] sm:$0xff]
        %v487 = vld [vmem:[#allocation6 + $0x130] sm:$0xff]
        %v488 = vld [vmem:[#allocation6 + $0x138] sm:$0xff]
        %v489 = vld [vmem:[#allocation6 + $0x140] sm:$0xff]
        %v490 = vld [vmem:[#allocation6 + $0x148] sm:$0xff]
        %v491 = vld [vmem:[#allocation6 + $0x150] sm:$0xff]
        %v492 = vld [vmem:[#allocation6 + $0x158] sm:$0xff]
        %v493 = vld [vmem:[#allocation6 + $0x160] sm:$0xff]
        %v494 = vld [vmem:[#allocation6 + $0x168] sm:$0xff]
        %v495 = vld [vmem:[#allocation6 + $0x170] sm:$0xff]
        %v496 = vld [vmem:[#allocation6 + $0x178] sm:$0xff]
        %v497 = vld [vmem:[#allocation6 + $0x180] sm:$0xff]
        %v498 = vld [vmem:[#allocation6 + $0x188] sm:$0xff]
        %v499 = vld [vmem:[#allocation6 + $0x190] sm:$0xff]
        %v500 = vld [vmem:[#allocation6 + $0x198] sm:$0xff]
        %v501 = vld [vmem:[#allocation6 + $0x1a0] sm:$0xff]
        %v502 = vld [vmem:[#allocation6 + $0x1a8] sm:$0xff]
        %v503 = vld [vmem:[#allocation6 + $0x1b0] sm:$0xff]
        %v504 = vld [vmem:[#allocation6 + $0x1b8] sm:$0xff]
        %v505 = vld [vmem:[#allocation6 + $0x1c0] sm:$0xff]
        %v506 = vld [vmem:[#allocation6 + $0x1c8] sm:$0xff]
        %v507 = vld [vmem:[#allocation6 + $0x1d0] sm:$0xff]
        %v508 = vld [vmem:[#allocation6 + $0x1d8] sm:$0xff]
        %v509 = vld [vmem:[#allocation6 + $0x1e0] sm:$0xff]
        %v510 = vld [vmem:[#allocation6 + $0x1e8] sm:$0xff]
        %v511 = vld [vmem:[#allocation6 + $0x1f0] sm:$0xff]
        %v512 = vld [vmem:[#allocation6 + $0x1f8] sm:$0xff]
        %v513 = vpack.c.bf16 %v450, %v449
        %v514 = vpack.c.bf16 %v452, %v451
        %v515 = vpack.c.bf16 %v454, %v453
        %v516 = vpack.c.bf16 %v456, %v455
        %v517 = vpack.c.bf16 %v458, %v457
        %v518 = vpack.c.bf16 %v460, %v459
        %v519 = vpack.c.bf16 %v462, %v461
        %v520 = vpack.c.bf16 %v464, %v463
        %v521 = vpack.c.bf16 %v466, %v465
        %v522 = vpack.c.bf16 %v468, %v467
        %v523 = vpack.c.bf16 %v470, %v469
        %v524 = vpack.c.bf16 %v472, %v471
        %v525 = vpack.c.bf16 %v474, %v473
        %v526 = vpack.c.bf16 %v476, %v475
        %v527 = vpack.c.bf16 %v478, %v477
        %v528 = vpack.c.bf16 %v480, %v479
        %v529 = vpack.c.bf16 %v482, %v481
        %v530 = vpack.c.bf16 %v484, %v483
        %v531 = vpack.c.bf16 %v486, %v485
        %v532 = vpack.c.bf16 %v488, %v487
        %v533 = vpack.c.bf16 %v490, %v489
        %v534 = vpack.c.bf16 %v492, %v491
        %v535 = vpack.c.bf16 %v494, %v493
        %v536 = vpack.c.bf16 %v496, %v495
        %v537 = vpack.c.bf16 %v498, %v497
        %v538 = vpack.c.bf16 %v500, %v499
        %v539 = vpack.c.bf16 %v502, %v501
        %v540 = vpack.c.bf16 %v504, %v503
        %v541 = vpack.c.bf16 %v506, %v505
        %v542 = vpack.c.bf16 %v508, %v507
        %v543 = vpack.c.bf16 %v510, %v509
        %v544 = vpack.c.bf16 %v512, %v511
        %v545 = vunpack.c.l.bf16 %v513
        %v546 = vunpack.c.h.bf16 %v513
        %v547 = vunpack.c.l.bf16 %v514
        %v548 = vunpack.c.h.bf16 %v514
        %v549 = vunpack.c.l.bf16 %v515
        %v550 = vunpack.c.h.bf16 %v515
        %v551 = vunpack.c.l.bf16 %v516
        %v552 = vunpack.c.h.bf16 %v516
        %v553 = vunpack.c.l.bf16 %v517
        %v554 = vunpack.c.h.bf16 %v517
        %v555 = vunpack.c.l.bf16 %v518
        %v556 = vunpack.c.h.bf16 %v518
        %v557 = vunpack.c.l.bf16 %v519
        %v558 = vunpack.c.h.bf16 %v519
        %v559 = vunpack.c.l.bf16 %v520
        %v560 = vunpack.c.h.bf16 %v520
        %v561 = vunpack.c.l.bf16 %v521
        %v562 = vunpack.c.h.bf16 %v521
        %v563 = vunpack.c.l.bf16 %v522
        %v564 = vunpack.c.h.bf16 %v522
        %v565 = vunpack.c.l.bf16 %v523
        %v566 = vunpack.c.h.bf16 %v523
        %v567 = vunpack.c.l.bf16 %v524
        %v568 = vunpack.c.h.bf16 %v524
        %v569 = vunpack.c.l.bf16 %v525
        %v570 = vunpack.c.h.bf16 %v525
        %v571 = vunpack.c.l.bf16 %v526
        %v572 = vunpack.c.h.bf16 %v526
        %v573 = vunpack.c.l.bf16 %v527
        %v574 = vunpack.c.h.bf16 %v527
        %v575 = vunpack.c.l.bf16 %v528
        %v576 = vunpack.c.h.bf16 %v528
        %v577 = vunpack.c.l.bf16 %v529
        %v578 = vunpack.c.h.bf16 %v529
        %v579 = vunpack.c.l.bf16 %v530
        %v580 = vunpack.c.h.bf16 %v530
        %v581 = vunpack.c.l.bf16 %v531
        %v582 = vunpack.c.h.bf16 %v531
        %v583 = vunpack.c.l.bf16 %v532
        %v584 = vunpack.c.h.bf16 %v532
        %v585 = vunpack.c.l.bf16 %v533
        %v586 = vunpack.c.h.bf16 %v533
        %v587 = vunpack.c.l.bf16 %v534
        %v588 = vunpack.c.h.bf16 %v534
        %v589 = vunpack.c.l.bf16 %v535
        %v590 = vunpack.c.h.bf16 %v535
        %v591 = vunpack.c.l.bf16 %v536
        %v592 = vunpack.c.h.bf16 %v536
        %v593 = vunpack.c.l.bf16 %v537
        %v594 = vunpack.c.h.bf16 %v537
        %v595 = vunpack.c.l.bf16 %v538
        %v596 = vunpack.c.h.bf16 %v538
        %v597 = vunpack.c.l.bf16 %v539
        %v598 = vunpack.c.h.bf16 %v539
        %v599 = vunpack.c.l.bf16 %v540
        %v600 = vunpack.c.h.bf16 %v540
        %v601 = vunpack.c.l.bf16 %v541
        %v602 = vunpack.c.h.bf16 %v541
        %v603 = vunpack.c.l.bf16 %v542
        %v604 = vunpack.c.h.bf16 %v542
        %v605 = vunpack.c.l.bf16 %v543
        %v606 = vunpack.c.h.bf16 %v543
        %v607 = vunpack.c.l.bf16 %v544
        %v608 = vunpack.c.h.bf16 %v544
        %v609 = vsub.f32 %v449, %v545
        %v610 = vsub.f32 %v450, %v546
        %v611 = vsub.f32 %v451, %v547
        %v612 = vsub.f32 %v452, %v548
        %v613 = vsub.f32 %v453, %v549
        %v614 = vsub.f32 %v454, %v550
        %v615 = vsub.f32 %v455, %v551
        %v616 = vsub.f32 %v456, %v552
        %v617 = vsub.f32 %v457, %v553
        %v618 = vsub.f32 %v458, %v554
        %v619 = vsub.f32 %v459, %v555
        %v620 = vsub.f32 %v460, %v556
        %v621 = vsub.f32 %v461, %v557
        %v622 = vsub.f32 %v462, %v558
        %v623 = vsub.f32 %v463, %v559
        %v624 = vsub.f32 %v464, %v560
        %v625 = vsub.f32 %v465, %v561
        %v626 = vsub.f32 %v466, %v562
        %v627 = vsub.f32 %v467, %v563
        %v628 = vsub.f32 %v468, %v564
        %v629 = vsub.f32 %v469, %v565
        %v630 = vsub.f32 %v470, %v566
        %v631 = vsub.f32 %v471, %v567
        %v632 = vsub.f32 %v472, %v568
        %v633 = vsub.f32 %v473, %v569
        %v634 = vsub.f32 %v474, %v570
        %v635 = vsub.f32 %v475, %v571
        %v636 = vsub.f32 %v476, %v572
        %v637 = vsub.f32 %v477, %v573
        %v638 = vsub.f32 %v478, %v574
        %v639 = vsub.f32 %v479, %v575
        %v640 = vsub.f32 %v480, %v576
        %v641 = vsub.f32 %v481, %v577
        %v642 = vsub.f32 %v482, %v578
        %v643 = vsub.f32 %v483, %v579
        %v644 = vsub.f32 %v484, %v580
        %v645 = vsub.f32 %v485, %v581
        %v646 = vsub.f32 %v486, %v582
        %v647 = vsub.f32 %v487, %v583
        %v648 = vsub.f32 %v488, %v584
        %v649 = vsub.f32 %v489, %v585
        %v650 = vsub.f32 %v490, %v586
        %v651 = vsub.f32 %v491, %v587
        %v652 = vsub.f32 %v492, %v588
        %v653 = vsub.f32 %v493, %v589
        %v654 = vsub.f32 %v494, %v590
        %v655 = vsub.f32 %v495, %v591
        %v656 = vsub.f32 %v496, %v592
        %v657 = vsub.f32 %v497, %v593
        %v658 = vsub.f32 %v498, %v594
        %v659 = vsub.f32 %v499, %v595
        %v660 = vsub.f32 %v500, %v596
        %v661 = vsub.f32 %v501, %v597
        %v662 = vsub.f32 %v502, %v598
        %v663 = vsub.f32 %v503, %v599
        %v664 = vsub.f32 %v504, %v600
        %v665 = vsub.f32 %v505, %v601
        %v666 = vsub.f32 %v506, %v602
        %v667 = vsub.f32 %v507, %v603
        %v668 = vsub.f32 %v508, %v604
        %v669 = vsub.f32 %v509, %v605
        %v670 = vsub.f32 %v510, %v606
        %v671 = vsub.f32 %v511, %v607
        %v672 = vsub.f32 %v512, %v608
        %v673 = vpack.c.bf16 %v610, %v609
        %v674 = vpack.c.bf16 %v612, %v611
        %v675 = vpack.c.bf16 %v614, %v613
        %v676 = vpack.c.bf16 %v616, %v615
        %v677 = vpack.c.bf16 %v618, %v617
        %v678 = vpack.c.bf16 %v620, %v619
        %v679 = vpack.c.bf16 %v622, %v621
        %v680 = vpack.c.bf16 %v624, %v623
        %v681 = vpack.c.bf16 %v626, %v625
        %v682 = vpack.c.bf16 %v628, %v627
        %v683 = vpack.c.bf16 %v630, %v629
        %v684 = vpack.c.bf16 %v632, %v631
        %v685 = vpack.c.bf16 %v634, %v633
        %v686 = vpack.c.bf16 %v636, %v635
        %v687 = vpack.c.bf16 %v638, %v637
        %v688 = vpack.c.bf16 %v640, %v639
        %v689 = vpack.c.bf16 %v642, %v641
        %v690 = vpack.c.bf16 %v644, %v643
        %v691 = vpack.c.bf16 %v646, %v645
        %v692 = vpack.c.bf16 %v648, %v647
        %v693 = vpack.c.bf16 %v650, %v649
        %v694 = vpack.c.bf16 %v652, %v651
        %v695 = vpack.c.bf16 %v654, %v653
        %v696 = vpack.c.bf16 %v656, %v655
        %v697 = vpack.c.bf16 %v658, %v657
        %v698 = vpack.c.bf16 %v660, %v659
        %v699 = vpack.c.bf16 %v662, %v661
        %v700 = vpack.c.bf16 %v664, %v663
        %v701 = vpack.c.bf16 %v666, %v665
        %v702 = vpack.c.bf16 %v668, %v667
        %v703 = vpack.c.bf16 %v670, %v669
        %v704 = vpack.c.bf16 %v672, %v671
        %v705 = vcvt.s32.f32 %v445
        %v706 = vcvt.s32.f32 %v446
        %v707 = vcvt.s32.f32 %v447
        %v708 = vcvt.s32.f32 %v448
        %v709 = vpack.c.bf16 %v705, %v705
        %v710 = vpack.c.bf16 %v706, %v706
        %v711 = vpack.c.bf16 %v707, %v707
        %v712 = vpack.c.bf16 %v708, %v708
        %v713 = vld [vmem:[#allocation2] sm:$0xff]
        %714 = vmatprep.subr.bf16.mxu0 0
        %715 = vmatpush1.bf16.msra.mxu0 %v513
        %716 = vmatprep.subr.bf16.mxu0 0
        %717 = vmatpush1.bf16.msra.mxu0 %v514
        %718 = vmatprep.subr.bf16.mxu0 0
        %719 = vmatpush1.bf16.msra.mxu0 %v515
        %720 = vmatprep.subr.bf16.mxu0 0
        %721 = vmatpush1.bf16.msra.mxu0 %v516
        %722 = vmatprep.subr.bf16.mxu0 0
        %723 = vmatpush1.bf16.msra.mxu0 %v517
        %724 = vmatprep.subr.bf16.mxu0 0
        %725 = vmatpush1.bf16.msra.mxu0 %v518
        %726 = vmatprep.subr.bf16.mxu0 0
        %727 = vmatpush1.bf16.msra.mxu0 %v519
        %728 = vmatprep.subr.bf16.mxu0 0
        %729 = vmatpush1.bf16.msra.mxu0 %v520
        %730 = vmatprep.subr.bf16.mxu0 0
        %731 = vmatpush1.bf16.msra.mxu0 %v521
        %732 = vmatprep.subr.bf16.mxu0 0
        %733 = vmatpush1.bf16.msra.mxu0 %v522
        %734 = vmatprep.subr.bf16.mxu0 0
        %735 = vmatpush1.bf16.msra.mxu0 %v523
        %736 = vmatprep.subr.bf16.mxu0 0
        %737 = vmatpush1.bf16.msra.mxu0 %v524
        %738 = vmatprep.subr.bf16.mxu0 0
        %739 = vmatpush1.bf16.msra.mxu0 %v525
        %740 = vmatprep.subr.bf16.mxu0 0
        %741 = vmatpush1.bf16.msra.mxu0 %v526
        %742 = vmatprep.subr.bf16.mxu0 0
        %743 = vmatpush1.bf16.msra.mxu0 %v527
        %744 = vmatprep.subr.bf16.mxu0 0
        %745 = vmatpush1.bf16.msra.mxu0 %v528
        %746 = vmatprep.mubr.bf16.mxu0 %v710
        %747 = vmatmul.mubr.bf16.gmra.mrb[0].mxu0 %v709
        %v748 = vpop.f32.mrb[0].mxu0
        %v749 = vadd.f32 0.0, %v748
        %v750 = vpop.f32.mrb[0].mxu0
        %v751 = vpop.f32.mrb[0].mxu0
        %v752 = vpop.f32.mrb[0].mxu0
        %753 = vdwg.mxu0
        %754 = vmatprep.subr.bf16.mxu0 0
        %755 = vmatpush1.bf16.msra.mxu0 %v529
        %756 = vmatprep.subr.bf16.mxu0 0
        %757 = vmatpush1.bf16.msra.mxu0 %v530
        %758 = vmatprep.subr.bf16.mxu0 0
        %759 = vmatpush1.bf16.msra.mxu0 %v531
        %760 = vmatprep.subr.bf16.mxu0 0
        %761 = vmatpush1.bf16.msra.mxu0 %v532
        %762 = vmatprep.subr.bf16.mxu0 0
        %763 = vmatpush1.bf16.msra.mxu0 %v533
        %764 = vmatprep.subr.bf16.mxu0 0
        %765 = vmatpush1.bf16.msra.mxu0 %v534
        %766 = vmatprep.subr.bf16.mxu0 0
        %767 = vmatpush1.bf16.msra.mxu0 %v535
        %768 = vmatprep.subr.bf16.mxu0 0
        %769 = vmatpush1.bf16.msra.mxu0 %v536
        %770 = vmatprep.subr.bf16.mxu0 0
        %771 = vmatpush1.bf16.msra.mxu0 %v537
        %772 = vmatprep.subr.bf16.mxu0 0
        %773 = vmatpush1.bf16.msra.mxu0 %v538
        %774 = vmatprep.subr.bf16.mxu0 0
        %775 = vmatpush1.bf16.msra.mxu0 %v539
        %776 = vmatprep.subr.bf16.mxu0 0
        %777 = vmatpush1.bf16.msra.mxu0 %v540
        %778 = vmatprep.subr.bf16.mxu0 0
        %779 = vmatpush1.bf16.msra.mxu0 %v541
        %780 = vmatprep.subr.bf16.mxu0 0
        %781 = vmatpush1.bf16.msra.mxu0 %v542
        %782 = vmatprep.subr.bf16.mxu0 0
        %783 = vmatpush1.bf16.msra.mxu0 %v543
        %784 = vmatprep.subr.bf16.mxu0 0
        %785 = vmatpush1.bf16.msra.mxu0 %v544
        %786 = vmatprep.mubr.bf16.mxu0 %v712
        %787 = vmatmul.mubr.bf16.gmra.mrb[0].mxu0 %v711
        %v788 = vpop.f32.mrb[0].mxu0
        %v789 = vadd.f32 %v749, %v788
        %v790 = vpop.f32.mrb[0].mxu0
        %v791 = vpop.f32.mrb[0].mxu0
        %v792 = vpop.f32.mrb[0].mxu0
        %793 = vdwg.mxu0
        %v794 = vadd.f32 %v713, %v789
        %795 = vst [vmem:[#allocation2] sm:$0xff] %v794
        %v796 = vld [vmem:[#allocation2] sm:$0xff]
        %797 = vmatprep.subr.bf16.mxu0 0
        %798 = vmatpush1.bf16.msra.mxu0 %v673
        %799 = vmatprep.subr.bf16.mxu0 0
        %800 = vmatpush1.bf16.msra.mxu0 %v674
        %801 = vmatprep.subr.bf16.mxu0 0
        %802 = vmatpush1.bf16.msra.mxu0 %v675
        %803 = vmatprep.subr.bf16.mxu0 0
        %804 = vmatpush1.bf16.msra.mxu0 %v676
        %805 = vmatprep.subr.bf16.mxu0 0
        %806 = vmatpush1.bf16.msra.mxu0 %v677
        %807 = vmatprep.subr.bf16.mxu0 0
        %808 = vmatpush1.bf16.msra.mxu0 %v678
        %809 = vmatprep.subr.bf16.mxu0 0
        %810 = vmatpush1.bf16.msra.mxu0 %v679
        %811 = vmatprep.subr.bf16.mxu0 0
        %812 = vmatpush1.bf16.msra.mxu0 %v680
        %813 = vmatprep.subr.bf16.mxu0 0
        %814 = vmatpush1.bf16.msra.mxu0 %v681
        %815 = vmatprep.subr.bf16.mxu0 0
        %816 = vmatpush1.bf16.msra.mxu0 %v682
        %817 = vmatprep.subr.bf16.mxu0 0
        %818 = vmatpush1.bf16.msra.mxu0 %v683
        %819 = vmatprep.subr.bf16.mxu0 0
        %820 = vmatpush1.bf16.msra.mxu0 %v684
        %821 = vmatprep.subr.bf16.mxu0 0
        %822 = vmatpush1.bf16.msra.mxu0 %v685
        %823 = vmatprep.subr.bf16.mxu0 0
        %824 = vmatpush1.bf16.msra.mxu0 %v686
        %825 = vmatprep.subr.bf16.mxu0 0
        %826 = vmatpush1.bf16.msra.mxu0 %v687
        %827 = vmatprep.subr.bf16.mxu0 0
        %828 = vmatpush1.bf16.msra.mxu0 %v688
        %829 = vmatprep.mubr.bf16.mxu0 %v710
        %830 = vmatmul.mubr.bf16.gmra.mrb[0].mxu0 %v709
        %v831 = vpop.f32.mrb[0].mxu0
        %v832 = vadd.f32 0.0, %v831
        %v833 = vpop.f32.mrb[0].mxu0
        %v834 = vpop.f32.mrb[0].mxu0
        %v835 = vpop.f32.mrb[0].mxu0
        %836 = vdwg.mxu0
        %837 = vmatprep.subr.bf16.mxu0 0
        %838 = vmatpush1.bf16.msra.mxu0 %v689
        %839 = vmatprep.subr.bf16.mxu0 0
        %840 = vmatpush1.bf16.msra.mxu0 %v690
        %841 = vmatprep.subr.bf16.mxu0 0
        %842 = vmatpush1.bf16.msra.mxu0 %v691
        %843 = vmatprep.subr.bf16.mxu0 0
        %844 = vmatpush1.bf16.msra.mxu0 %v692
        %845 = vmatprep.subr.bf16.mxu0 0
        %846 = vmatpush1.bf16.msra.mxu0 %v693
        %847 = vmatprep.subr.bf16.mxu0 0
        %848 = vmatpush1.bf16.msra.mxu0 %v694
        %849 = vmatprep.subr.bf16.mxu0 0
        %850 = vmatpush1.bf16.msra.mxu0 %v695
        %851 = vmatprep.subr.bf16.mxu0 0
        %852 = vmatpush1.bf16.msra.mxu0 %v696
        %853 = vmatprep.subr.bf16.mxu0 0
        %854 = vmatpush1.bf16.msra.mxu0 %v697
        %855 = vmatprep.subr.bf16.mxu0 0
        %856 = vmatpush1.bf16.msra.mxu0 %v698
        %857 = vmatprep.subr.bf16.mxu0 0
        %858 = vmatpush1.bf16.msra.mxu0 %v699
        %859 = vmatprep.subr.bf16.mxu0 0
        %860 = vmatpush1.bf16.msra.mxu0 %v700
        %861 = vmatprep.subr.bf16.mxu0 0
        %862 = vmatpush1.bf16.msra.mxu0 %v701
        %863 = vmatprep.subr.bf16.mxu0 0
        %864 = vmatpush1.bf16.msra.mxu0 %v702
        %865 = vmatprep.subr.bf16.mxu0 0
        %866 = vmatpush1.bf16.msra.mxu0 %v703
        %867 = vmatprep.subr.bf16.mxu0 0
        %868 = vmatpush1.bf16.msra.mxu0 %v704
        %869 = vmatprep.mubr.bf16.mxu0 %v712
        %870 = vmatmul.mubr.bf16.gmra.mrb[0].mxu0 %v711
        %v871 = vpop.f32.mrb[0].mxu0
        %v872 = vadd.f32 %v832, %v871
        %v873 = vpop.f32.mrb[0].mxu0
        %v874 = vpop.f32.mrb[0].mxu0
        %v875 = vpop.f32.mrb[0].mxu0
        %876 = vdwg.mxu0
        %v877 = vadd.f32 %v796, %v872
        %878 = vst [vmem:[#allocation2] sm:$0xff] %v877
        // Predicated region
        $region41: #{tpu_custom_call.1} parent=27 // pred_check
          %p879 = pneg %p196
        $region42: #{tpu_custom_call.1} parent=27 // pred_check_branch
          %881 = sbr.rel (%p879) target = $region44
        $region43: #{tpu_custom_call.1} parent=27 // pred_region
          %v882 = vld [vmem:[#allocation2] sm:$0xff]
          %883 = vst [vmem:[%s193] sm:$0xff] %v882
        $region44: #{tpu_custom_call.1} parent=27 // pred_fallthru
          _
        %s884 = sand.u32 %s92, 1
        %s885 = scalar_lea.sflag [#allocation5], %s884
        %s886 = sand.u32 %s92, 1
        %s887 = smul.addr %s886, 8
        %s888 = scalar_lea.vmem [#allocation8], %s887
        // Predicated region
        $region45: #{tpu_custom_call.1} parent=27 // pred_check
          %p889 = pneg %p102
        $region46: #{tpu_custom_call.1} parent=27 // pred_check_branch
          %891 = sbr.rel (%p889) target = $region48
        $region47: #{tpu_custom_call.1} parent=27 // pred_region
          %s893 = ssub.s32 128, 128
          %894 = vsyncadd %s885, %s893
          %s895 = smul.addr %s24, 128
          %s896 = scalar_lea.hbm %s2, %s895
          %s898 = sshll.u32 %s888, 4
          %s899 = int_to_ptr.vmem [resolvable:$true] %s898
          %901 = dma.vmem_to_hbm [thread:$0]  %s899, 128, %s896, %s885
        $region48: #{tpu_custom_call.1} parent=27 // pred_fallthru
          _
      $region28: #{tpu_custom_call.1} parent=5 // pred_fallthru
        _
      %p902 = scmp.le.s32.totalorder 2, %s15
      // Predicated region
      $region49: #{tpu_custom_call.1} parent=5 // pred_check
        %p903 = pneg %p902
      $region50: #{tpu_custom_call.1} parent=5 // pred_check_branch
        %905 = sbr.rel (%p903) target = $region52
      $region51: #{tpu_custom_call.1} parent=5 // pred_region
        %s906 = ssub.s32 %s15, 2
        // Predicated region
        $region53: #{tpu_custom_call.1} parent=51 // pred_check
          %p907 = pneg %p108
        $region54: #{tpu_custom_call.1} parent=51 // pred_check_branch
          %909 = sbr.rel (%p907) target = $region56
        $region55: #{tpu_custom_call.1} parent=51 // pred_region
          %s910 = sand.u32 %s93, 1
          %s911 = scalar_lea.sflag [#allocation5], %s910
          %s912 = sand.u32 %s93, 1
          %s913 = smul.addr %s912, 8
          %s914 = scalar_lea.vmem [#allocation8], %s913
          %915 = dma.done %s911, 128
        $region56: #{tpu_custom_call.1} parent=51 // pred_fallthru
          _
      $region52: #{tpu_custom_call.1} parent=5 // pred_fallthru
        _
    $region6: #{tpu_custom_call.1} parent=1 // loop_footer
      %s19 = sadd.s32 1, %s15
    $region7: #{tpu_custom_call.1} parent=1 // loop_footer_branch
      %14 = sbr.rel target = $region3
    $region8: #{tpu_custom_call.1} parent=1 // loop_exit
      _
    %916 = vsyncpa [#allocation4], 1
    %s917 = scalar_lea.sflag [#allocation4], 1
    %918 = vsyncpa %s917, 1
    %919 = vsyncpa [#allocation7], 1
    %920 = vsyncpa [#allocation5], 1
    %s921 = scalar_lea.sflag [#allocation5], 1
    %922 = vsyncpa %s921, 1

</llo_original>
